<compile_context>
chip_gen: v7x
topology: tpu7x:2x2x1
jax: 0.10.0
libtpu: 0.0.40
codegen_flags: <defaults>
</compile_context>

<pallas_src>
import functools

import jax
import jax.numpy as jnp
from jax.experimental import pallas as pl
from jax.experimental.pallas import tpu as pltpu


def _round_up(x, m):
    return ((x + m - 1) // m) * m


def _sublanes_for(dtype):
    itemsize = jnp.dtype(dtype).itemsize
    return 8 * max(1, 4 // itemsize)   # 8 for f32, 16 for bf16, 32 for int8/fp8


def _choose_layout(n, d, sublanes):
    """Pick a lane width: prefer (no pad + lane-periodic), then no pad, then pad."""
    candidates = (4096, 2048, 1024, 512, 256, 128)
    for lanes in candidates:                      # no padding AND cheap scale/bias path
        if n % (lanes * sublanes) == 0 and lanes % d == 0:
            return lanes, False
    for lanes in candidates:                      # no padding, in-kernel mask path
        if n % (lanes * sublanes) == 0:
            return lanes, False
    for lanes in (1024, 2048, 4096, 512, 256, 128):  # padded, cheap path if possible
        if lanes % d == 0:
            return lanes, True
    return 1024, True


def _pick_block_rows(rows, lanes, itemsize, sublanes, target_block_bytes):
    tb = (target_block_bytes // (lanes * itemsize)) // sublanes * sublanes
    tb = max(sublanes, tb)
    tb = min(tb, rows)
    # Guarantee >= 2 grid steps whenever the data allows, so both v7x TensorCores
    # get work under dimension_semantics=("parallel",).
    if rows >= 2 * sublanes and (rows + tb - 1) // tb < 2:
        tb = min(rows, _round_up((rows + 1) // 2, sublanes))
    return tb


def _scale_bias_kernel(scale_ref, bias_ref, c_ref, o_ref):
    # out = c * scale + bias ; scale/bias are (1, lanes) vectors broadcast over rows.
    o_ref[...] = c_ref[...] * scale_ref[...] + bias_ref[...]


def _masked_kernel(gamma_ref, c_ref, o_ref, *, d, tb, lanes):
    # General fallback when lanes % d != 0: compute the zeroth-coefficient mask
    # from the flat element index, using mod-d arithmetic on small ints so it
    # never overflows int32 even for huge tensors.
    c = c_ref[...]
    g = gamma_ref[0].astype(c.dtype)
    row = jax.lax.broadcasted_iota(jnp.int32, c.shape, 0)
    lane = jax.lax.broadcasted_iota(jnp.int32, c.shape, 1)
    row_mod = (pl.program_id(0) * tb + row) % d
    phase = (row_mod * (lanes % d) + lane) % d      # == flat_idx % d
    o_ref[...] = jnp.where(phase == 0, c * g + 1, c)


def zeroth_gamma_multiplication(c, cep_order, gamma, *, target_block_bytes=6 * 1024 * 1024):
    """Pallas equivalent of ZerothGammaMultiplication.forward.

    c: floating-point array of shape (..., cep_order + 1)
    gamma: Python float or traced JAX scalar.
    """
    d = cep_order + 1
    assert c.shape[-1] == d, f"last dim {c.shape[-1]} != cep_order + 1 = {d}"

    orig_shape = c.shape
    dtype = c.dtype
    itemsize = jnp.dtype(dtype).itemsize
    sublanes = _sublanes_for(dtype)

    flat = c.reshape(-1)
    n = flat.shape[0]
    lanes, need_pad = _choose_layout(n, d, sublanes)

    if need_pad:
        rows = _round_up(max((n + lanes - 1) // lanes, 1), sublanes)
        n_padded = rows * lanes
        flat = jnp.pad(flat, (0, n_padded - n))
    else:
        rows = n // lanes          # already a multiple of `sublanes` by construction
        n_padded = n
    c2d = flat.reshape(rows, lanes)

    tb = _pick_block_rows(rows, lanes, itemsize, sublanes, target_block_bytes)
    grid = ((rows + tb - 1) // tb,)

    block_spec = pl.BlockSpec((tb, lanes), lambda i: (i, 0))
    cost = pl.CostEstimate(
        flops=2 * n_padded,                       # one mul + one add per element
        transcendentals=0,
        bytes_accessed=2 * n_padded * itemsize,   # read N + write N
    )
    cparams = pltpu.CompilerParams(
        dimension_semantics=("parallel",),
        vmem_limit_bytes=48 * 1024 * 1024,        # 4 x ~6 MiB double-buffering + headroom
    )

    if lanes % d == 0:
        # Fast path: zeroth-coefficient pattern is lane-periodic -> precomputed
        # (1, lanes) scale/bias vectors; kernel is a pure streaming FMA.
        lane_idx = jnp.arange(lanes, dtype=jnp.int32).reshape(1, lanes)
        is_zeroth = (lane_idx % d) == 0
        g = jnp.asarray(gamma, dtype)
        scale = jnp.where(is_zeroth, g, jnp.asarray(1, dtype)).astype(dtype)
        bias = jnp.where(is_zeroth, jnp.asarray(1, dtype), jnp.asarray(0, dtype)).astype(dtype)
        vec_spec = pl.BlockSpec((1, lanes), lambda i: (0, 0))
        out2d = pl.pallas_call(
            _scale_bias_kernel,
            out_shape=jax.ShapeDtypeStruct((rows, lanes), dtype),
            grid=grid,
            in_specs=[vec_spec, vec_spec, block_spec],
            out_specs=block_spec,
            compiler_params=cparams,
            cost_estimate=cost,
        )(scale, bias, c2d)
    else:
        gamma_arr = jnp.asarray(gamma, dtype=jnp.float32).reshape(1)
        out2d = pl.pallas_call(
            functools.partial(_masked_kernel, d=d, tb=tb, lanes=lanes),
            out_shape=jax.ShapeDtypeStruct((rows, lanes), dtype),
            grid=grid,
            in_specs=[
                pl.BlockSpec(memory_space=pltpu.MemorySpace.SMEM),  # gamma scalar
                block_spec,
            ],
            out_specs=block_spec,
            compiler_params=cparams,
            cost_estimate=cost,
        )(gamma_arr, c2d)

    out_flat = out2d.reshape(-1)
    if n_padded != n:
        out_flat = out_flat[:n]
    return out_flat.reshape(orig_shape)


def _reference(c, gamma):
    c0 = c[..., :1] * gamma + 1
    return jnp.concatenate([c0, c[..., 1:]], axis=-1)


if __name__ == "__main__":
    key = jax.random.PRNGKey(0)

    # Case 1: power-of-two order (scale/bias fast path, padded fallback), f32.
    cep_order, gamma = 15, -0.5
    c = jax.random.normal(key, (2, 8, cep_order + 1), dtype=jnp.float32)
    out = jax.block_until_ready(zeroth_gamma_multiplication(c, cep_order, gamma))
    ref = _reference(c, gamma)
    assert out.shape == c.shape
    assert jnp.allclose(out, ref, atol=1e-6, rtol=1e-6), "case1 mismatch"

    # Case 2: non-power-of-two order (in-kernel mask path), f32.
    cep_order2, gamma2 = 25, 0.25
    c2 = jax.random.normal(jax.random.PRNGKey(0), (3, 7, cep_order2 + 1), dtype=jnp.float32)
    out2 = jax.block_until_ready(zeroth_gamma_multiplication(c2, cep_order2, gamma2))
    ref2 = _reference(c2, gamma2)
    assert jnp.allclose(out2, ref2, atol=1e-6, rtol=1e-6), "case2 mismatch"

    # Case 3: size divisible by lanes*sublanes (no-pad / no-slice path), f32.
    c3 = jax.random.normal(jax.random.PRNGKey(0), (8, 64, 16), dtype=jnp.float32)
    out3 = jax.block_until_ready(zeroth_gamma_multiplication(c3, 15, -0.5))
    ref3 = _reference(c3, -0.5)
    assert jnp.allclose(out3, ref3, atol=1e-6, rtol=1e-6), "case3 mismatch"

    # Case 4: bf16 input (sublane packing = 16), scale/bias path.
    c4 = jax.random.normal(jax.random.PRNGKey(0), (4, 16, 16), dtype=jnp.bfloat16)
    out4 = jax.block_until_ready(zeroth_gamma_multiplication(c4, 15, -0.5))
    ref4 = _reference(c4, -0.5)
    assert jnp.allclose(out4.astype(jnp.float32), ref4.astype(jnp.float32),
                        atol=1e-2, rtol=1e-2), "case4 mismatch"

    print("KERNEL_OK")
</pallas_src>

<mosaic_0001>
module attributes {stable_mosaic.version = 11 : i64} {
  func.func @_scale_bias_kernel(%arg0: i32, %arg1: memref<1x1024xf32, #tpu.memory_space<vmem>>, %arg2: memref<1x1024xf32, #tpu.memory_space<vmem>>, %arg3: memref<8x1024xf32, #tpu.memory_space<vmem>>, %arg4: memref<8x1024xf32, #tpu.memory_space<vmem>>) attributes {dimension_semantics = [#tpu.dimension_semantics<parallel>], iteration_bounds = array<i64: 1>, scalar_prefetch = 0 : i64, scratch_operands = 0 : i64, tpu.core_type = #tpu.core_type<tc>, window_params = [{pipeline_mode = #tpu.pipeline_mode<synchronous>, transform_indices = @transform_0, window_bounds = array<i64: 1, 1024>}, {pipeline_mode = #tpu.pipeline_mode<synchronous>, transform_indices = @transform_1, window_bounds = array<i64: 1, 1024>}, {transform_indices = @transform_2, window_bounds = array<i64: 8, 1024>}, {transform_indices = @transform_3, window_bounds = array<i64: 8, 1024>}]} {
    %c0 = arith.constant 0 : index
    %c0_0 = arith.constant 0 : index
    %0 = vector.load %arg3[%c0, %c0_0] : memref<8x1024xf32, #tpu.memory_space<vmem>>, vector<8x1024xf32>
    %c0_1 = arith.constant 0 : index
    %c0_2 = arith.constant 0 : index
    %1 = vector.load %arg1[%c0_1, %c0_2] : memref<1x1024xf32, #tpu.memory_space<vmem>>, vector<1x1024xf32>
    %2 = vector.broadcast %1 : vector<1x1024xf32> to vector<8x1024xf32>
    %3 = arith.mulf %0, %2 : vector<8x1024xf32>
    %c0_3 = arith.constant 0 : index
    %c0_4 = arith.constant 0 : index
    %4 = vector.load %arg2[%c0_3, %c0_4] : memref<1x1024xf32, #tpu.memory_space<vmem>>, vector<1x1024xf32>
    %5 = vector.broadcast %4 : vector<1x1024xf32> to vector<8x1024xf32>
    %6 = arith.addf %3, %5 : vector<8x1024xf32>
    %c0_5 = arith.constant 0 : index
    %c0_6 = arith.constant 0 : index
    %7 = vector.load %arg4[%c0_5, %c0_6] : memref<8x1024xf32, #tpu.memory_space<vmem>>, vector<8x1024xf32>
    tpu.vector_store %arg4[%c0_5, %c0_6], %6 {strides = array<i32>} : memref<8x1024xf32, #tpu.memory_space<vmem>>, vector<8x1024xf32>,
    return
  }
  func.func @transform_0(%arg0: i32) -> (i32, i32) {
    %c0_i32 = arith.constant 0 : i32
    %c0_i32_0 = arith.constant 0 : i32
    %c0_i32_1 = arith.constant 0 : i32
    return %c0_i32, %c0_i32_0 : i32, i32
  }
  func.func @transform_1(%arg0: i32) -> (i32, i32) {
    %c0_i32 = arith.constant 0 : i32
    %c0_i32_0 = arith.constant 0 : i32
    %c0_i32_1 = arith.constant 0 : i32
    return %c0_i32, %c0_i32_0 : i32, i32
  }
  func.func @transform_2(%arg0: i32) -> (i32, i32) {
    %c0_i32 = arith.constant 0 : i32
    %c0_i32_0 = arith.constant 0 : i32
    return %arg0, %c0_i32 : i32, i32
  }
  func.func @transform_3(%arg0: i32) -> (i32, i32) {
    %c0_i32 = arith.constant 0 : i32
    %c0_i32_0 = arith.constant 0 : i32
    return %arg0, %c0_i32 : i32, i32
  }
}

</mosaic_0001>

<llo_original>
// kernel: tpu_custom_call.1
$region0: #{tpu_custom_call.1}
  #allocation0 [shape = 'u32[]', space=smem, size = 0x4, offset = 0x4, fixed_abs, tag = 'smem constant byte address 0x4 - core index']
  #allocation1 [shape = 'u32[144,128]{1,0:T(1,128)}', space=vmem, size = 0x12000, scoped, tag = 'internal scratch']
  %s0 = inlined_call_operand.hbm [shape: f32[1,1024], index: 0, kind: input, shape index: {}]
  %s1 = inlined_call_operand.hbm [shape: f32[1,1024], index: 1, kind: input, shape index: {}]
  %s2 = inlined_call_operand.hbm [shape: f32[8,1024], index: 2, kind: input, shape index: {}]
  %s3 = inlined_call_operand.hbm [shape: f32[8,1024], index: 3, kind: output, shape index: {}]
  %s4 = sld [smem:[#allocation0]]
  $region34: #{tpu_custom_call.1} parent=0
    _
  %s6 = ssub.s32 1, %s4
  %s7 = scalar_select 0, %s6, %s4
  $region1: #{tpu_custom_call.1} parent=0
    #allocation2 [shape = 'u8[4096]{0}', space=vmem, size = 0x1000, scoped, tag = 'input window, operand 0, single buffered']
    #allocation3 [shape = 's32[1]{0}', space=sflag, size = 0x4, scoped, tag = 'scoped memory for tpu_custom_call.1']
    #allocation4 [shape = 's32[1]{0}', space=sflag, size = 0x4, scoped, tag = 'scoped memory for tpu_custom_call.1']
    #allocation5 [shape = 'u8[4096]{0}', space=vmem, size = 0x1000, scoped, tag = 'input window, operand 1, single buffered']
    #allocation6 [shape = 's32[1]{0}', space=sflag, size = 0x4, scoped, tag = 'scoped memory for tpu_custom_call.1']
    #allocation7 [shape = 'u8[32768]{0}', space=vmem, size = 0x8000, scoped, tag = 'input window, operand 2, single buffered']
    #allocation8 [shape = 'u8[32768]{0}', space=vmem, size = 0x8000, scoped, tag = 'output window, operand 0, single buffered']
    %8 = vsyncpa [#allocation3], 0
    %9 = vsyncpa [#allocation6], 0
    %10 = vsyncpa [#allocation4], 0
    // Predicated region
    $region2: #{tpu_custom_call.1} parent=1 // pred_check
      _
    $region3: #{tpu_custom_call.1} parent=1 // pred_check_branch
      %12 = sbr.rel (0) target = $region5
    $region4: #{tpu_custom_call.1} parent=1 // pred_region
      %s14 = ssub.s32 128, 128
      %15 = vsyncadd [#allocation3], %s14
      %s17 = sshll.u32 [#allocation2], 4
      %s18 = int_to_ptr.vmem [resolvable:$true] %s17
      %20 = dma.hbm_to_vmem [thread:$0]  %s0, 128, %s18, [#allocation3]
    $region5: #{tpu_custom_call.1} parent=1 // pred_fallthru
      _
    // Predicated region
    $region6: #{tpu_custom_call.1} parent=1 // pred_check
      _
    $region7: #{tpu_custom_call.1} parent=1 // pred_check_branch
      %22 = sbr.rel (0) target = $region9
    $region8: #{tpu_custom_call.1} parent=1 // pred_region
      %s24 = ssub.s32 128, 128
      %25 = vsyncadd [#allocation6], %s24
      %s27 = sshll.u32 [#allocation5], 4
      %s28 = int_to_ptr.vmem [resolvable:$true] %s27
      %30 = dma.hbm_to_vmem [thread:$0]  %s1, 128, %s28, [#allocation6]
    $region9: #{tpu_custom_call.1} parent=1 // pred_fallthru
      _
    // Predicated region
    $region10: #{tpu_custom_call.1} parent=1 // pred_check
      _
    $region11: #{tpu_custom_call.1} parent=1 // pred_check_branch
      %32 = sbr.rel (0) target = $region13
    $region12: #{tpu_custom_call.1} parent=1 // pred_region
      %s34 = ssub.s32 1024, 1024
      %35 = vsyncadd [#allocation6], %s34
      %s37 = sshll.u32 [#allocation7], 4
      %s38 = int_to_ptr.vmem [resolvable:$true] %s37
      %40 = dma.hbm_to_vmem [thread:$0]  %s2, 1024, %s38, [#allocation6]
    $region13: #{tpu_custom_call.1} parent=1 // pred_fallthru
      _
    // Predicated region
    $region14: #{tpu_custom_call.1} parent=1 // pred_check
      _
    $region15: #{tpu_custom_call.1} parent=1 // pred_check_branch
      %42 = sbr.rel (0) target = $region17
    $region16: #{tpu_custom_call.1} parent=1 // pred_region
      %43 = dma.done [#allocation3], 128
    $region17: #{tpu_custom_call.1} parent=1 // pred_fallthru
      _
    // Predicated region
    $region18: #{tpu_custom_call.1} parent=1 // pred_check
      _
    $region19: #{tpu_custom_call.1} parent=1 // pred_check_branch
      %45 = sbr.rel (0) target = $region21
    $region20: #{tpu_custom_call.1} parent=1 // pred_region
      %46 = dma.done [#allocation6], 128
    $region21: #{tpu_custom_call.1} parent=1 // pred_fallthru
      _
    // Predicated region
    $region22: #{tpu_custom_call.1} parent=1 // pred_check
      _
    $region23: #{tpu_custom_call.1} parent=1 // pred_check_branch
      %48 = sbr.rel (0) target = $region25
    $region24: #{tpu_custom_call.1} parent=1 // pred_region
      %49 = dma.done [#allocation6], 1024
    $region25: #{tpu_custom_call.1} parent=1 // pred_fallthru
      _
    %v50 = vld [vmem:[#allocation7] sm:$0xff]
    %v51 = vld [vmem:[#allocation7 + $0x8] sm:$0xff]
    %v52 = vld [vmem:[#allocation7 + $0x10] sm:$0xff]
    %v53 = vld [vmem:[#allocation7 + $0x18] sm:$0xff]
    %v54 = vld [vmem:[#allocation7 + $0x20] sm:$0xff]
    %v55 = vld [vmem:[#allocation7 + $0x28] sm:$0xff]
    %v56 = vld [vmem:[#allocation7 + $0x30] sm:$0xff]
    %v57 = vld [vmem:[#allocation7 + $0x38] sm:$0xff]
    %v58 = vld [vmem:[#allocation2] sm:$0xff]
    %v60 = vlaneseq
    %v61 = vshrl.u32 %v60, 7
    %v62 = vsub.s32 0, %v61
    %v63 = vrot.slane %v58, %v62
    %v64 = vlaneseq
    %v65 = vshrl.u32 %v64, 7
    %v66 = vsub.s32 1, %v65
    %v67 = vrot.slane %v58, %v66
    %v68 = vlaneseq
    %v69 = vshrl.u32 %v68, 7
    %v70 = vsub.s32 2, %v69
    %v71 = vrot.slane %v58, %v70
    %v72 = vlaneseq
    %v73 = vshrl.u32 %v72, 7
    %v74 = vsub.s32 3, %v73
    %v75 = vrot.slane %v58, %v74
    %v76 = vlaneseq
    %v77 = vshrl.u32 %v76, 7
    %v78 = vsub.s32 4, %v77
    %v79 = vrot.slane %v58, %v78
    %v80 = vlaneseq
    %v81 = vshrl.u32 %v80, 7
    %v82 = vsub.s32 5, %v81
    %v83 = vrot.slane %v58, %v82
    %v84 = vlaneseq
    %v85 = vshrl.u32 %v84, 7
    %v86 = vsub.s32 6, %v85
    %v87 = vrot.slane %v58, %v86
    %v88 = vlaneseq
    %v89 = vshrl.u32 %v88, 7
    %v90 = vsub.s32 7, %v89
    %v91 = vrot.slane %v58, %v90
    %v100 = vmul.f32 %v50, %v63
    %v101 = vmul.f32 %v51, %v67
    %v102 = vmul.f32 %v52, %v71
    %v103 = vmul.f32 %v53, %v75
    %v104 = vmul.f32 %v54, %v79
    %v105 = vmul.f32 %v55, %v83
    %v106 = vmul.f32 %v56, %v87
    %v107 = vmul.f32 %v57, %v91
    %v108 = vld [vmem:[#allocation5] sm:$0xff]
    %v110 = vlaneseq
    %v111 = vshrl.u32 %v110, 7
    %v112 = vsub.s32 0, %v111
    %v113 = vrot.slane %v108, %v112
    %v114 = vlaneseq
    %v115 = vshrl.u32 %v114, 7
    %v116 = vsub.s32 1, %v115
    %v117 = vrot.slane %v108, %v116
    %v118 = vlaneseq
    %v119 = vshrl.u32 %v118, 7
    %v120 = vsub.s32 2, %v119
    %v121 = vrot.slane %v108, %v120
    %v122 = vlaneseq
    %v123 = vshrl.u32 %v122, 7
    %v124 = vsub.s32 3, %v123
    %v125 = vrot.slane %v108, %v124
    %v126 = vlaneseq
    %v127 = vshrl.u32 %v126, 7
    %v128 = vsub.s32 4, %v127
    %v129 = vrot.slane %v108, %v128
    %v130 = vlaneseq
    %v131 = vshrl.u32 %v130, 7
    %v132 = vsub.s32 5, %v131
    %v133 = vrot.slane %v108, %v132
    %v134 = vlaneseq
    %v135 = vshrl.u32 %v134, 7
    %v136 = vsub.s32 6, %v135
    %v137 = vrot.slane %v108, %v136
    %v138 = vlaneseq
    %v139 = vshrl.u32 %v138, 7
    %v140 = vsub.s32 7, %v139
    %v141 = vrot.slane %v108, %v140
    %v150 = vadd.f32 %v100, %v113
    %v151 = vadd.f32 %v101, %v117
    %v152 = vadd.f32 %v102, %v121
    %v153 = vadd.f32 %v103, %v125
    %v154 = vadd.f32 %v104, %v129
    %v155 = vadd.f32 %v105, %v133
    %v156 = vadd.f32 %v106, %v137
    %v157 = vadd.f32 %v107, %v141
    %158 = vst [vmem:[#allocation8] sm:$0xff] %v150
    %159 = vst [vmem:[#allocation8 + $0x8] sm:$0xff] %v151
    %160 = vst [vmem:[#allocation8 + $0x10] sm:$0xff] %v152
    %161 = vst [vmem:[#allocation8 + $0x18] sm:$0xff] %v153
    %162 = vst [vmem:[#allocation8 + $0x20] sm:$0xff] %v154
    %163 = vst [vmem:[#allocation8 + $0x28] sm:$0xff] %v155
    %164 = vst [vmem:[#allocation8 + $0x30] sm:$0xff] %v156
    %165 = vst [vmem:[#allocation8 + $0x38] sm:$0xff] %v157
    // Predicated region
    $region26: #{tpu_custom_call.1} parent=1 // pred_check
      _
    $region27: #{tpu_custom_call.1} parent=1 // pred_check_branch
      %167 = sbr.rel (0) target = $region29
    $region28: #{tpu_custom_call.1} parent=1 // pred_region
      %s169 = ssub.s32 1024, 1024
      %170 = vsyncadd [#allocation4], %s169
      %s172 = sshll.u32 [#allocation8], 4
      %s173 = int_to_ptr.vmem [resolvable:$true] %s172
      %175 = dma.vmem_to_hbm [thread:$0]  %s173, 1024, %s3, [#allocation4]
    $region29: #{tpu_custom_call.1} parent=1 // pred_fallthru
      _
    // Predicated region
    $region30: #{tpu_custom_call.1} parent=1 // pred_check
      _
    $region31: #{tpu_custom_call.1} parent=1 // pred_check_branch
      %177 = sbr.rel (0) target = $region33
    $region32: #{tpu_custom_call.1} parent=1 // pred_region
      %178 = dma.done [#allocation4], 1024
    $region33: #{tpu_custom_call.1} parent=1 // pred_fallthru
      _
    %179 = vsyncpa [#allocation3], 1
    %180 = vsyncpa [#allocation6], 1
    %181 = vsyncpa [#allocation4], 1

</llo_original>
